<compile_context>
chip_gen: v6e
topology: v6e:2x2x1
jax: 0.10.0
libtpu: 0.0.40
codegen_flags: <defaults>
</compile_context>

<pallas_src>
import math
from functools import partial

import jax
import jax.numpy as jnp
from jax import lax
from jax.experimental import pallas as pl
from jax.experimental.pallas import tpu as pltpu


_P = 3.14159265   # same (non-exact) pi constant the PyTorch module uses
_EPS = 1e-12      # F.normalize default eps


def _cheb(m, c):
    # T_m(cos t) = cos(m t); matches the module's self.mlambda table.
    if m == 0:
        return jnp.ones_like(c)
    if m == 1:
        return c
    if m == 2:
        return 2.0 * c * c - 1.0
    if m == 3:
        return (4.0 * c * c - 3.0) * c
    if m == 4:
        c2 = c * c
        return (8.0 * c2 - 8.0) * c2 + 1.0
    c2 = c * c
    return ((16.0 * c2 - 20.0) * c2 + 5.0) * c


def _make_kernel(m, inv_one_plus_lamb, tc):
    # k = floor(m * acos(c) / P) == #{ j in 1..m : c <= cos(j*P/m) }
    # (exact equivalence: cos is strictly decreasing on [0, pi]).
    thresholds = [math.cos(j * _P / m) for j in range(1, m + 1)]

    def kernel(xn_ref, w_ref, nrm_ref, lab_ref, o_ref):
        # xn_ref : (tb, D)  mxu_dtype, pre-normalized rows of x
        # w_ref  : (D, tc)  mxu_dtype, pre-normalized, pre-transposed W
        # nrm_ref: (tb, 1)  f32, ||x|| per row
        # lab_ref: (tb, 1)  i32 (padded rows carry -1 -> one_hot is all zero)
        cos = jnp.dot(xn_ref[...], w_ref[...], preferred_element_type=jnp.float32)
        cos = jnp.clip(cos, -1.0, 1.0)
        tb = cos.shape[0]

        # One-hot of the label within this C tile.  program_id(0) is the C-tile index
        # because C is the leading grid axis.
        col = pl.program_id(0) * tc + lax.broadcasted_iota(jnp.int32, (tb, tc), 1)
        one_hot = (col == lab_ref[...]).astype(jnp.float32)

        # Margin math only for the target column (a (tb,1) vector).  If the target
        # column is not in this tile, cos_t is 0 and the correction is masked away
        # by one_hot anyway.
        cos_t = jnp.sum(one_hot * cos, axis=1, keepdims=True)        # (tb, 1)
        cmt = _cheb(m, cos_t)
        k = jnp.zeros_like(cos_t)
        sign = jnp.ones_like(cos_t)
        for t in thresholds:
            hit = (cos_t <= t).astype(jnp.float32)
            k = k + hit
            sign = sign * (1.0 - 2.0 * hit)                          # accumulated (-1)**k
        phi = sign * cmt - 2.0 * k
        corr = (phi - cos_t) * inv_one_plus_lamb                     # (tb, 1)

        o_ref[...] = ((cos + one_hot * corr) * nrm_ref[...]).astype(o_ref.dtype)

    return kernel


def _round_up(a, b):
    return (a + b - 1) // b * b


@partial(jax.jit, static_argnames=("m", "it", "base", "gamma", "power", "lambda_min",
                                   "tb", "tc", "mxu_dtype", "out_dtype"))
def sphere_product(x, weight, label, *, m=4, it=1, base=1000.0, gamma=0.12,
                   power=1, lambda_min=5.0, tb=512, tc=512,
                   mxu_dtype=jnp.bfloat16, out_dtype=jnp.float32):
    """Forward of SphereProduct for a given iteration count `it` (module's self.iter)."""
    lamb = max(lambda_min, base * (1.0 + gamma * it) ** (-power))
    B, D = x.shape
    C, D2 = weight.shape
    assert D == D2

    # ---- one-time prologue (fused under jit): normalize x rows and W rows.
    x32 = x.astype(jnp.float32)
    sumsq = jnp.sum(x32 * x32, axis=1, keepdims=True)                  # (B, 1)
    inv_norm = lax.rsqrt(jnp.maximum(sumsq, _EPS * _EPS))              # 1 / max(||x||, eps)
    # x_norm == ||x|| except for rows with ||x|| < 1e-12 (gives sumsq/eps ~ 0; benign).
    x_norm = sumsq * inv_norm
    x_n = (x32 * inv_norm).astype(mxu_dtype)                           # (B, D) bf16/f32

    w32 = weight.astype(jnp.float32)
    w_inv = lax.rsqrt(jnp.maximum(jnp.sum(w32 * w32, axis=1, keepdims=True), _EPS * _EPS))
    w_t = (w32 * w_inv).T.astype(mxu_dtype)                            # (D, C)

    # ---- tile sizes: lane-dense output (tc multiple of 128), tb multiple of 8.
    tb_eff = min(_round_up(tb, 8), _round_up(B, 8))
    tc_eff = min(_round_up(tc, 128), _round_up(C, 128))
    B_pad = _round_up(B, tb_eff)
    C_pad = _round_up(C, tc_eff)

    lab = label.reshape(-1, 1).astype(jnp.int32)
    if B_pad != B:
        x_n = jnp.pad(x_n, ((0, B_pad - B), (0, 0)))
        x_norm = jnp.pad(x_norm, ((0, B_pad - B), (0, 0)))
        # Padded rows get label -1 so their one-hot is all-zero inside the kernel;
        # padded rows/cols are sliced off at the end -- do NOT remove the final slice.
        lab = jnp.pad(lab, ((0, B_pad - B), (0, 0)), constant_values=-1)
    if C_pad != C:
        w_t = jnp.pad(w_t, ((0, 0), (0, C_pad - C)))

    n_bt = B_pad // tb_eff
    n_ct = C_pad // tc_eff

    kernel = _make_kernel(m, 1.0 / (1.0 + float(lamb)), tc_eff)

    mxu_bytes = jnp.dtype(mxu_dtype).itemsize
    out_bytes = jnp.dtype(out_dtype).itemsize
    blk_bytes = (tb_eff * D * mxu_bytes + D * tc_eff * mxu_bytes
                 + tb_eff * 8 + tb_eff * tc_eff * out_bytes)
    # Double-buffered blocks + headroom; capped well under v7x's 64 MiB physical VMEM.
    vmem_limit = int(min(max(4 * blk_bytes, 16 << 20), 48 << 20))

    # Real DMA pattern: x/norm/label streamed once per C tile, W read once (resident
    # across the inner B axis), output written once.
    cost = pl.CostEstimate(
        flops=2 * B_pad * C_pad * D + 6 * B_pad * C_pad,
        transcendentals=0,
        bytes_accessed=(B_pad * D * mxu_bytes) * n_ct
                       + D * C_pad * mxu_bytes
                       + (B_pad * 8) * n_ct
                       + B_pad * C_pad * out_bytes,
    )

    # Grid: C tiles lead and are the only "parallel" axis, so a 2-TC chip (v7x) splits
    # the dominant W stream (each core reads half of W); B tiles iterate inside, with
    # the (D, tc) W block resident across them.
    out = pl.pallas_call(
        kernel,
        out_shape=jax.ShapeDtypeStruct((B_pad, C_pad), out_dtype),
        grid_spec=pltpu.PrefetchScalarGridSpec(
            num_scalar_prefetch=0,
            grid=(n_ct, n_bt),
            in_specs=[
                pl.BlockSpec((tb_eff, D), lambda j, i: (i, 0)),     # normalized x tile
                pl.BlockSpec((D, tc_eff), lambda j, i: (0, j)),     # normalized W^T tile (resident)
                pl.BlockSpec((tb_eff, 1), lambda j, i: (i, 0)),     # ||x||
                pl.BlockSpec((tb_eff, 1), lambda j, i: (i, 0)),     # labels
            ],
            out_specs=pl.BlockSpec((tb_eff, tc_eff), lambda j, i: (i, j)),
        ),
        compiler_params=pltpu.CompilerParams(
            dimension_semantics=("parallel", "arbitrary"),
            vmem_limit_bytes=vmem_limit,
        ),
        cost_estimate=cost,
    )(x_n, w_t, x_norm, lab)
    # TODO(synk): if profiling on v6e shows the streamed x DMA exposed for small D,
    # add pipeline_mode=pl.Buffered(3) on the x BlockSpec.

    return out[:B, :C]


def _reference(x, w, label, m=4, it=1):
    """Pure-JAX transcription of the PyTorch forward (correctness check)."""
    lamb = max(5.0, 1000.0 * (1.0 + 0.12 * it) ** (-1))
    xn = x / jnp.maximum(jnp.linalg.norm(x, axis=1, keepdims=True), 1e-12)
    wn = w / jnp.maximum(jnp.linalg.norm(w, axis=1, keepdims=True), 1e-12)
    cos = jnp.clip(xn @ wn.T, -1.0, 1.0)
    cmt = _cheb(m, cos)
    theta = jnp.arccos(cos)
    k = jnp.floor(m * theta / 3.14159265)
    phi = (-1.0) ** k * cmt - 2.0 * k
    nf = jnp.linalg.norm(x, axis=1, keepdims=True)
    oh = jax.nn.one_hot(label, w.shape[0], dtype=jnp.float32)
    return (oh * (phi - cos) / (1.0 + lamb) + cos) * nf


if __name__ == "__main__":
    B, in_features, out_features, m = 8, 64, 16, 4

    key = jax.random.PRNGKey(0)
    kx, kw, kl = jax.random.split(key, 3)

    # Deterministic xavier_uniform-style init for weight (out_features, in_features).
    bound = math.sqrt(6.0 / (in_features + out_features))
    weight = jax.random.uniform(kw, (out_features, in_features),
                                dtype=jnp.float32, minval=-bound, maxval=bound)
    x = jax.random.normal(kx, (B, in_features), dtype=jnp.float32)
    label = jax.random.randint(kl, (B,), 0, out_features, dtype=jnp.int32)

    ref = _reference(x, weight, label, m=m, it=1)

    # f32 MXU path: tight check against the PyTorch-equivalent reference.
    out_f32 = jax.block_until_ready(
        sphere_product(x, weight, label, m=m, it=1, mxu_dtype=jnp.float32))
    assert out_f32.shape == (B, out_features)
    assert jnp.allclose(out_f32, ref, rtol=1e-4, atol=1e-4), (
        f"f32 max abs err {jnp.max(jnp.abs(out_f32 - ref))}")

    # bf16 MXU path (default, fast).  The margin branch k can legitimately flip for
    # cosines within bf16 rounding of a Chebyshev threshold, so only the non-target
    # logits (pure cos * ||x||) are checked, at a bf16-appropriate tolerance.
    out_bf16 = jax.block_until_ready(sphere_product(x, weight, label, m=m, it=1))
    assert out_bf16.shape == (B, out_features)
    assert bool(jnp.all(jnp.isfinite(out_bf16)))
    non_target = jax.nn.one_hot(label, out_features, dtype=jnp.float32) < 0.5
    assert jnp.allclose(jnp.where(non_target, out_bf16, 0.0),
                        jnp.where(non_target, ref, 0.0), rtol=5e-2, atol=5e-2), (
        f"bf16 max abs err (non-target) "
        f"{jnp.max(jnp.abs(jnp.where(non_target, out_bf16 - ref, 0.0)))}")

    print("KERNEL_OK")
</pallas_src>

<mosaic_0001>
module attributes {stable_mosaic.version = 11 : i64} {
  func.func @kernel(%arg0: i32, %arg1: i32, %arg2: memref<8x64xf32, #tpu.memory_space<vmem>>, %arg3: memref<64x128xf32, #tpu.memory_space<vmem>>, %arg4: memref<8x1xf32, #tpu.memory_space<vmem>>, %arg5: memref<8x1xi32, #tpu.memory_space<vmem>>, %arg6: memref<8x128xf32, #tpu.memory_space<vmem>>) attributes {dimension_semantics = [#tpu.dimension_semantics<parallel>, #tpu.dimension_semantics<arbitrary>], iteration_bounds = array<i64: 1, 1>, scalar_prefetch = 0 : i64, scratch_operands = 0 : i64, tpu.core_type = #tpu.core_type<tc>, window_params = [{transform_indices = @transform_0, window_bounds = array<i64: 8, 64>}, {transform_indices = @transform_1, window_bounds = array<i64: 64, 128>}, {transform_indices = @transform_2, window_bounds = array<i64: 8, 1>}, {transform_indices = @transform_3, window_bounds = array<i64: 8, 1>}, {transform_indices = @transform_4, window_bounds = array<i64: 8, 128>}]} {
    %c0 = arith.constant 0 : index
    %c0_0 = arith.constant 0 : index
    %0 = vector.load %arg2[%c0, %c0_0] : memref<8x64xf32, #tpu.memory_space<vmem>>, vector<8x64xf32>
    %c0_1 = arith.constant 0 : index
    %c0_2 = arith.constant 0 : index
    %1 = vector.load %arg3[%c0_1, %c0_2] : memref<64x128xf32, #tpu.memory_space<vmem>>, vector<64x128xf32>
    %cst = arith.constant dense<0.000000e+00> : vector<8x128xf32>
    %2 = tpu.matmul %0, %1, %cst {dimension_numbers = #tpu.dot_dimension_numbers<[1], [0], [0], [1], [0, 0, 1, 1], [], []>} : vector<8x64xf32>, vector<64x128xf32>, vector<8x128xf32> -> vector<8x128xf32>
    %cst_3 = arith.constant -1.000000e+00 : f32
    %cst_4 = arith.constant 1.000000e+00 : f32
    %3 = vector.broadcast %cst_3 : f32 to vector<8x128xf32>
    %4 = arith.maximumf %3, %2 : vector<8x128xf32>
    %5 = vector.broadcast %cst_4 : f32 to vector<8x128xf32>
    %6 = arith.minimumf %5, %4 : vector<8x128xf32>
    %c128_i32 = arith.constant 128 : i32
    %7 = arith.muli %arg0, %c128_i32 : i32
    %8 = tpu.iota {dimensions = array<i32: 1>} : vector<8x128xi32>
    %9 = vector.broadcast %7 : i32 to vector<8x128xi32>
    %10 = arith.addi %9, %8 : vector<8x128xi32>
    %c0_5 = arith.constant 0 : index
    %c0_6 = arith.constant 0 : index
    %11 = vector.load %arg5[%c0_5, %c0_6] : memref<8x1xi32, #tpu.memory_space<vmem>>, vector<8x1xi32>
    %12 = vector.broadcast %11 : vector<8x1xi32> to vector<8x128xi32>
    %13 = arith.cmpi eq, %10, %12 : vector<8x128xi32>
    %14 = arith.extui %13 : vector<8x128xi1> to vector<8x128xi32>
    %15 = arith.sitofp %14 : vector<8x128xi32> to vector<8x128xf32>
    %16 = arith.mulf %15, %6 : vector<8x128xf32>
    %cst_7 = arith.constant dense<0.000000e+00> : vector<8xf32>
    %17 = vector.multi_reduction <add>, %16, %cst_7 [1] : vector<8x128xf32> to vector<8xf32>
    %18 = vector.shape_cast %17 : vector<8xf32> to vector<8x1xf32>
    %19 = arith.mulf %18, %18 : vector<8x1xf32>
    %cst_8 = arith.constant 8.000000e+00 : f32
    %20 = vector.broadcast %cst_8 : f32 to vector<8x1xf32>
    %21 = arith.mulf %20, %19 : vector<8x1xf32>
    %cst_9 = arith.constant 8.000000e+00 : f32
    %22 = vector.broadcast %cst_9 : f32 to vector<8x1xf32>
    %23 = arith.subf %21, %22 : vector<8x1xf32>
    %24 = arith.mulf %23, %19 : vector<8x1xf32>
    %cst_10 = arith.constant 1.000000e+00 : f32
    %25 = vector.broadcast %cst_10 : f32 to vector<8x1xf32>
    %26 = arith.addf %24, %25 : vector<8x1xf32>
    %cst_11 = arith.constant 0.000000e+00 : f32
    %27 = vector.broadcast %cst_11 : f32 to vector<8x1xf32>
    %cst_12 = arith.constant 1.000000e+00 : f32
    %28 = vector.broadcast %cst_12 : f32 to vector<8x1xf32>
    %cst_13 = arith.constant 0.707106769 : f32
    %29 = vector.broadcast %cst_13 : f32 to vector<8x1xf32>
    %30 = arith.cmpf ole, %18, %29 : vector<8x1xf32>
    %31 = arith.extui %30 : vector<8x1xi1> to vector<8x1xi32>
    %32 = arith.sitofp %31 : vector<8x1xi32> to vector<8x1xf32>
    %33 = arith.addf %27, %32 : vector<8x1xf32>
    %cst_14 = arith.constant 2.000000e+00 : f32
    %34 = vector.broadcast %cst_14 : f32 to vector<8x1xf32>
    %35 = arith.mulf %34, %32 : vector<8x1xf32>
    %cst_15 = arith.constant 1.000000e+00 : f32
    %36 = vector.broadcast %cst_15 : f32 to vector<8x1xf32>
    %37 = arith.subf %36, %35 : vector<8x1xf32>
    %38 = arith.mulf %28, %37 : vector<8x1xf32>
    %cst_16 = arith.constant 1.79489656E-9 : f32
    %39 = vector.broadcast %cst_16 : f32 to vector<8x1xf32>
    %40 = arith.cmpf ole, %18, %39 : vector<8x1xf32>
    %41 = arith.extui %40 : vector<8x1xi1> to vector<8x1xi32>
    %42 = arith.sitofp %41 : vector<8x1xi32> to vector<8x1xf32>
    %43 = arith.addf %33, %42 : vector<8x1xf32>
    %cst_17 = arith.constant 2.000000e+00 : f32
    %44 = vector.broadcast %cst_17 : f32 to vector<8x1xf32>
    %45 = arith.mulf %44, %42 : vector<8x1xf32>
    %cst_18 = arith.constant 1.000000e+00 : f32
    %46 = vector.broadcast %cst_18 : f32 to vector<8x1xf32>
    %47 = arith.subf %46, %45 : vector<8x1xf32>
    %48 = arith.mulf %38, %47 : vector<8x1xf32>
    %cst_19 = arith.constant -0.707106769 : f32
    %49 = vector.broadcast %cst_19 : f32 to vector<8x1xf32>
    %50 = arith.cmpf ole, %18, %49 : vector<8x1xf32>
    %51 = arith.extui %50 : vector<8x1xi1> to vector<8x1xi32>
    %52 = arith.sitofp %51 : vector<8x1xi32> to vector<8x1xf32>
    %53 = arith.addf %43, %52 : vector<8x1xf32>
    %cst_20 = arith.constant 2.000000e+00 : f32
    %54 = vector.broadcast %cst_20 : f32 to vector<8x1xf32>
    %55 = arith.mulf %54, %52 : vector<8x1xf32>
    %cst_21 = arith.constant 1.000000e+00 : f32
    %56 = vector.broadcast %cst_21 : f32 to vector<8x1xf32>
    %57 = arith.subf %56, %55 : vector<8x1xf32>
    %58 = arith.mulf %48, %57 : vector<8x1xf32>
    %cst_22 = arith.constant -1.000000e+00 : f32
    %59 = vector.broadcast %cst_22 : f32 to vector<8x1xf32>
    %60 = arith.cmpf ole, %18, %59 : vector<8x1xf32>
    %61 = arith.extui %60 : vector<8x1xi1> to vector<8x1xi32>
    %62 = arith.sitofp %61 : vector<8x1xi32> to vector<8x1xf32>
    %63 = arith.addf %53, %62 : vector<8x1xf32>
    %cst_23 = arith.constant 2.000000e+00 : f32
    %64 = vector.broadcast %cst_23 : f32 to vector<8x1xf32>
    %65 = arith.mulf %64, %62 : vector<8x1xf32>
    %cst_24 = arith.constant 1.000000e+00 : f32
    %66 = vector.broadcast %cst_24 : f32 to vector<8x1xf32>
    %67 = arith.subf %66, %65 : vector<8x1xf32>
    %68 = arith.mulf %58, %67 : vector<8x1xf32>
    %69 = arith.mulf %68, %26 : vector<8x1xf32>
    %cst_25 = arith.constant 2.000000e+00 : f32
    %70 = vector.broadcast %cst_25 : f32 to vector<8x1xf32>
    %71 = arith.mulf %70, %63 : vector<8x1xf32>
    %72 = arith.subf %69, %71 : vector<8x1xf32>
    %73 = arith.subf %72, %18 : vector<8x1xf32>
    %cst_26 = arith.constant 0.00111874705 : f32
    %74 = vector.broadcast %cst_26 : f32 to vector<8x1xf32>
    %75 = arith.mulf %73, %74 : vector<8x1xf32>
    %76 = vector.broadcast %75 : vector<8x1xf32> to vector<8x128xf32>
    %77 = arith.mulf %15, %76 : vector<8x128xf32>
    %78 = arith.addf %6, %77 : vector<8x128xf32>
    %c0_27 = arith.constant 0 : index
    %c0_28 = arith.constant 0 : index
    %79 = vector.load %arg4[%c0_27, %c0_28] : memref<8x1xf32, #tpu.memory_space<vmem>>, vector<8x1xf32>
    %80 = vector.broadcast %79 : vector<8x1xf32> to vector<8x128xf32>
    %81 = arith.mulf %78, %80 : vector<8x128xf32>
    %c0_29 = arith.constant 0 : index
    %c0_30 = arith.constant 0 : index
    %82 = vector.load %arg6[%c0_29, %c0_30] : memref<8x128xf32, #tpu.memory_space<vmem>>, vector<8x128xf32>
    tpu.vector_store %arg6[%c0_29, %c0_30], %81 {strides = array<i32>} : memref<8x128xf32, #tpu.memory_space<vmem>>, vector<8x128xf32>,
    return
  }
  func.func @transform_0(%arg0: i32, %arg1: i32) -> (i32, i32) {
    %c0_i32 = arith.constant 0 : i32
    %c0_i32_0 = arith.constant 0 : i32
    return %arg1, %c0_i32 : i32, i32
  }
  func.func @transform_1(%arg0: i32, %arg1: i32) -> (i32, i32) {
    %c0_i32 = arith.constant 0 : i32
    %c0_i32_0 = arith.constant 0 : i32
    return %c0_i32, %arg0 : i32, i32
  }
  func.func @transform_2(%arg0: i32, %arg1: i32) -> (i32, i32) {
    %c0_i32 = arith.constant 0 : i32
    %c0_i32_0 = arith.constant 0 : i32
    return %arg1, %c0_i32 : i32, i32
  }
  func.func @transform_3(%arg0: i32, %arg1: i32) -> (i32, i32) {
    %c0_i32 = arith.constant 0 : i32
    %c0_i32_0 = arith.constant 0 : i32
    return %arg1, %c0_i32 : i32, i32
  }
  func.func @transform_4(%arg0: i32, %arg1: i32) -> (i32, i32) {
    %c0_i32 = arith.constant 0 : i32
    return %arg1, %arg0 : i32, i32
  }
}

</mosaic_0001>

<llo_original>
// kernel: sphere_product.1
$region0: #{sphere_product.1}
  #allocation0 [shape = 'u32[]', space=smem, size = 0x4, offset = 0x4, fixed_abs, tag = 'smem constant byte address 0x4 - core index']
  #allocation1 [shape = 'u32[144,128]{1,0:T(1,128)}', space=vmem, size = 0x12000, scoped, tag = 'internal scratch']
  %s0 = inlined_call_operand.vmem [shape: f32[8,64], index: 0, kind: input, shape index: {}]
  %s1 = inlined_call_operand.vmem [shape: f32[64,128], index: 1, kind: input, shape index: {}]
  %s2 = inlined_call_operand.vmem [shape: f32[8,1], index: 2, kind: input, shape index: {}]
  %s3 = inlined_call_operand.vmem [shape: s32[8,1], index: 3, kind: input, shape index: {}]
  %s4 = inlined_call_operand.hbm [shape: f32[8,128], index: 4, kind: output, shape index: {}]
  %s5 = sld [smem:[#allocation0]]
  $region26: #{sphere_product.1} parent=0
    _
  %s7 = ssub.s32 1, %s5
  %s8 = scalar_select 0, %s7, %s5
  $region1: #{sphere_product.1} parent=0
    #allocation2 [shape = 'u8[4096]{0}', space=vmem, size = 0x1000, scoped, tag = 'output window, operand 0, single buffered']
    #allocation3 [shape = 's32[1]{0}', space=sflag, size = 0x4, scoped, tag = 'scoped memory for sphere_product.1']
    %9 = vsyncpa [#allocation3], 0
    // Predicated region
    $region2: #{sphere_product.1} parent=1 // pred_check
      _
    $region3: #{sphere_product.1} parent=1 // pred_check_branch
      %11 = sbr.rel (0) target = $region5
    $region4: #{sphere_product.1} parent=1 // pred_region
      _
    $region5: #{sphere_product.1} parent=1 // pred_fallthru
      _
    // Predicated region
    $region6: #{sphere_product.1} parent=1 // pred_check
      _
    $region7: #{sphere_product.1} parent=1 // pred_check_branch
      %13 = sbr.rel (0) target = $region9
    $region8: #{sphere_product.1} parent=1 // pred_region
      _
    $region9: #{sphere_product.1} parent=1 // pred_fallthru
      _
    // Predicated region
    $region10: #{sphere_product.1} parent=1 // pred_check
      _
    $region11: #{sphere_product.1} parent=1 // pred_check_branch
      %15 = sbr.rel (0) target = $region13
    $region12: #{sphere_product.1} parent=1 // pred_region
      _
    $region13: #{sphere_product.1} parent=1 // pred_fallthru
      _
    // Predicated region
    $region14: #{sphere_product.1} parent=1 // pred_check
      _
    $region15: #{sphere_product.1} parent=1 // pred_check_branch
      %17 = sbr.rel (0) target = $region17
    $region16: #{sphere_product.1} parent=1 // pred_region
      _
    $region17: #{sphere_product.1} parent=1 // pred_fallthru
      _
    %v18 = vld [vmem:[%s0] sm:$0xff]
    %v19 = vld [vmem:[%s1] sm:$0xff]
    %v20 = vld [vmem:[%s1 + $0x8] sm:$0xff]
    %v21 = vld [vmem:[%s1 + $0x10] sm:$0xff]
    %v22 = vld [vmem:[%s1 + $0x18] sm:$0xff]
    %v23 = vld [vmem:[%s1 + $0x20] sm:$0xff]
    %v24 = vld [vmem:[%s1 + $0x28] sm:$0xff]
    %v25 = vld [vmem:[%s1 + $0x30] sm:$0xff]
    %v26 = vld [vmem:[%s1 + $0x38] sm:$0xff]
    %vm27 = vcmask 523264
    %v29 = vsel %vm27, %v18, 0
    %31 = vmatprep.subr.mxu0 0.0
    %32 = vmatpush1.msra.mxu0 0.0
    %33 = vmatprep.subr.mxu0 0.0
    %34 = vmatpush1.msra.mxu0 0.0
    %35 = vmatprep.subr.mxu0 0.0
    %36 = vmatpush1.msra.mxu0 0.0
    %37 = vmatprep.subr.mxu0 0.0
    %38 = vmatpush1.msra.mxu0 0.0
    %39 = vmatprep.subr.mxu0 0.0
    %40 = vmatpush1.msra.mxu0 0.0
    %41 = vmatprep.subr.mxu0 0.0
    %42 = vmatpush1.msra.mxu0 0.0
    %43 = vmatprep.subr.mxu0 0.0
    %44 = vmatpush1.msra.mxu0 0.0
    %45 = vmatprep.subr.mxu0 0.0
    %46 = vmatpush1.msra.mxu0 0.0
    %47 = vmatprep.subr.mxu0 0.0
    %48 = vmatpush1.msra.mxu0 %v26
    %49 = vmatprep.subr.mxu0 0.0
    %50 = vmatpush1.msra.mxu0 %v25
    %51 = vmatprep.subr.mxu0 0.0
    %52 = vmatpush1.msra.mxu0 %v24
    %53 = vmatprep.subr.mxu0 0.0
    %54 = vmatpush1.msra.mxu0 %v23
    %55 = vmatprep.subr.mxu0 0.0
    %56 = vmatpush1.msra.mxu0 %v22
    %57 = vmatprep.subr.mxu0 0.0
    %58 = vmatpush1.msra.mxu0 %v21
    %59 = vmatprep.subr.mxu0 0.0
    %60 = vmatpush1.msra.mxu0 %v20
    %61 = vmatprep.subr.mxu0 0.0
    %62 = vmatpush1.msra.mxu0 %v19
    %63 = vmatprep.subr.mxu0 0.0
    %64 = vmatpush2.msra.mxu0 0.0
    %65 = vmatprep.subr.mxu0 0.0
    %66 = vmatpush2.msra.mxu0 0.0
    %67 = vmatprep.subr.mxu0 0.0
    %68 = vmatpush2.msra.mxu0 0.0
    %69 = vmatprep.subr.mxu0 0.0
    %70 = vmatpush2.msra.mxu0 0.0
    %71 = vmatprep.subr.mxu0 0.0
    %72 = vmatpush2.msra.mxu0 0.0
    %73 = vmatprep.subr.mxu0 0.0
    %74 = vmatpush2.msra.mxu0 0.0
    %75 = vmatprep.subr.mxu0 0.0
    %76 = vmatpush2.msra.mxu0 0.0
    %77 = vmatprep.subr.mxu0 0.0
    %78 = vmatpush2.msra.mxu0 0.0
    %79 = vmatprep.subr.mxu0 0.0
    %80 = vmatpush2.msra.mxu0 0.0
    %81 = vmatprep.subr.mxu0 0.0
    %82 = vmatpush2.msra.mxu0 0.0
    %83 = vmatprep.subr.mxu0 0.0
    %84 = vmatpush2.msra.mxu0 0.0
    %85 = vmatprep.subr.mxu0 0.0
    %86 = vmatpush2.msra.mxu0 0.0
    %87 = vmatprep.subr.mxu0 0.0
    %88 = vmatpush2.msra.mxu0 0.0
    %89 = vmatprep.subr.mxu0 0.0
    %90 = vmatpush2.msra.mxu0 0.0
    %91 = vmatprep.subr.mxu0 0.0
    %92 = vmatpush2.msra.mxu0 0.0
    %93 = vmatprep.subr.mxu0 0.0
    %94 = vmatpush2.msra.mxu0 0.0
    %95 = vmatprep.mubr.f32.mxu0 0.0
    %96 = vmatmul.mubr.f32.gmra.mxu0 %v29
    %v97 = vpop.f32.mrf.mxu0
    %v98 = vadd.f32 0.0, %v97
    %v99 = vpop.f32.mrf.mxu0
    %100 = vdwg.mxu0
    %v101 = vmax.f32 %v98, -1.0
    %v102 = vmin.f32 %v101, 1.0
    %s103 = smul.u32 0, 128
    %v104 = vlaneseq
    %v105 = vand.u32 %v104, 127
    %v106 = vstv %s103
    %v107 = vadd.s32 %v106, %v105
    %v108 = vld [vmem:[%s3] sm:$0xff]
    %109 = vset.pattern.permute.xlu0 0
    %110 = vperm.xlu0 %109, %v108
    %v111 = vpop.permute.xlu0 %110
    %vm112 = vcmp.eq.s32.totalorder %v107, %v111
    %v113 = vsel %vm112, 1, 0
    %v114 = vcvt.s32.f32 %v113
    %v115 = vmul.f32 %v114, %v102
    %116 = vadd.xlane.f32.xlu0 %v115
    %v117 = vpop.xlane.xlu0 %116
    %v118 = vmul.f32 %v117, %v117
    %v119 = vmul.f32 %v118, 8.0
    %v120 = vsub.f32 %v119, 8.0
    %v121 = vmul.f32 %v120, %v118
    %v122 = vadd.f32 %v121, 1.0
    %vm123 = vcmp.le.f32.partialorder %v117, 0.70710677
    %v124 = vsel %vm123, 1, 0
    %v125 = vcvt.s32.f32 %v124
    %v126 = vadd.f32 %v125, 0.0
    %v127 = vmul.f32 %v125, 2.0
    %v128 = vsub.f32 1.0, %v127
    %vm129 = vcmp.le.f32.partialorder %v117, 1.7948966e-09
    %v130 = vsel %vm129, 1, 0
    %v131 = vcvt.s32.f32 %v130
    %v132 = vadd.f32 %v126, %v131
    %v133 = vmul.f32 %v131, 2.0
    %v134 = vsub.f32 1.0, %v133
    %v135 = vmul.f32 %v128, %v134
    %vm136 = vcmp.le.f32.partialorder %v117, -0.70710677
    %v137 = vsel %vm136, 1, 0
    %v138 = vcvt.s32.f32 %v137
    %v139 = vadd.f32 %v132, %v138
    %v140 = vmul.f32 %v138, 2.0
    %v141 = vsub.f32 1.0, %v140
    %v142 = vmul.f32 %v135, %v141
    %vm143 = vcmp.le.f32.partialorder %v117, -1.0
    %v144 = vsel %vm143, 1, 0
    %v145 = vcvt.s32.f32 %v144
    %v146 = vadd.f32 %v139, %v145
    %v147 = vmul.f32 %v145, 2.0
    %v148 = vsub.f32 1.0, %v147
    %v149 = vmul.f32 %v142, %v148
    %v150 = vmul.f32 %v149, %v122
    %v151 = vmul.f32 %v146, 2.0
    %v152 = vsub.f32 %v150, %v151
    %v153 = vsub.f32 %v152, %v117
    %v154 = vmul.f32 %v153, 0.001118747
    %v155 = vmul.f32 %v114, %v154
    %v156 = vadd.f32 %v102, %v155
    %v157 = vld [vmem:[%s2] sm:$0xff]
    %159 = vset.pattern.permute.xlu0 0
    %160 = vperm.xlu0 %159, %v157
    %v161 = vpop.permute.xlu0 %160
    %v163 = vmul.f32 %v156, %v161
    %164 = vst [vmem:[#allocation2] sm:$0xff] %v163
    // Predicated region
    $region18: #{sphere_product.1} parent=1 // pred_check
      _
    $region19: #{sphere_product.1} parent=1 // pred_check_branch
      %166 = sbr.rel (0) target = $region21
    $region20: #{sphere_product.1} parent=1 // pred_region
      %s168 = ssub.s32 128, 128
      %169 = vsyncadd [#allocation3], %s168
      %s171 = sshll.u32 [#allocation2], 4
      %s172 = int_to_ptr.vmem [resolvable:$true] %s171
      %174 = dma.vmem_to_hbm [thread:$0]  %s172, 128, %s4, [#allocation3]
    $region21: #{sphere_product.1} parent=1 // pred_fallthru
      _
    // Predicated region
    $region22: #{sphere_product.1} parent=1 // pred_check
      _
    $region23: #{sphere_product.1} parent=1 // pred_check_branch
      %176 = sbr.rel (0) target = $region25
    $region24: #{sphere_product.1} parent=1 // pred_region
      %177 = dma.done [#allocation3], 128
    $region25: #{sphere_product.1} parent=1 // pred_fallthru
      _
    %178 = vsyncpa [#allocation3], 1

</llo_original>
